<compile_context>
chip_gen: v5e
topology: v5e:2x2
jax: 0.10.0
libtpu: 0.0.40
codegen_flags: <defaults>
</compile_context>

<pallas_src>
import functools

import jax
import jax.numpy as jnp
from jax import lax
from jax.experimental import pallas as pl
from jax.experimental.pallas import tpu as pltpu

SCALE = 224.0
LANES = 128
SUBLANES = 8
_MAX_BLOCK_ROWS = 512  # 512*128*4B = 256 KiB per output block


def _mix(x):
    # splitmix32 finalizer: full-avalanche 32-bit hash (uint32 arithmetic wraps mod 2^32).
    x = (x ^ (x >> 16)) * jnp.uint32(0x7FEB352D)
    x = (x ^ (x >> 15)) * jnp.uint32(0x846CA68B)
    return x ^ (x >> 16)


# ----------------------------- kernel ---------------------------------------
def _random_coords_kernel(seed_ref, o_ref):
    # seed_ref: SMEM (1,) int32     o_ref: VMEM (blk_rows, 128) float32 (lane-dense slab)
    rows, cols = o_ref.shape
    row0 = pl.program_id(0) * rows

    # Flat element index of every lane in this block (counter for the hash-based PRNG).
    r = lax.broadcasted_iota(jnp.int32, (rows, cols), 0) + row0
    c = lax.broadcasted_iota(jnp.int32, (rows, cols), 1)
    idx = lax.bitcast_convert_type(r * cols + c, jnp.uint32)

    seed = lax.bitcast_convert_type(seed_ref[0], jnp.uint32)
    salt = _mix(seed + jnp.uint32(0x9E3779B9))

    # Counter-based PRNG: two mixing rounds of hash(seed, idx) -> 32 random bits/element.
    bits = _mix(idx ^ salt)
    bits = _mix(bits + jnp.uint32(0x85EBCA6B))

    # Mantissa trick: build a float32 bit pattern in [1, 2), subtract 1 -> uniform [0, 1).
    mant = (bits >> jnp.uint32(9)) | jnp.uint32(0x3F800000)
    u01 = lax.bitcast_convert_type(mant, jnp.float32) - 1.0

    o_ref[...] = u01 * SCALE  # uniform [0, 224), unmasked lane-dense store


# ----------------------------- wrapper ---------------------------------------
@functools.lru_cache(maxsize=None)
def _build_forward(batch: int):
    """Build (once per batch size) a jitted callable: seed_arr (1,) int32 -> (batch, 2) f32."""
    total = 2 * batch
    rows = -(-total // LANES)                                   # ceil(2B / 128)
    blk_rows = min(_MAX_BLOCK_ROWS, -(-rows // SUBLANES) * SUBLANES)
    rows_pad = -(-rows // blk_rows) * blk_rows                  # multiple of blk_rows
    grid = (rows_pad // blk_rows,)

    call = pl.pallas_call(
        _random_coords_kernel,
        out_shape=jax.ShapeDtypeStruct((rows_pad, LANES), jnp.float32),
        grid=grid,
        in_specs=[pl.BlockSpec(memory_space=pltpu.MemorySpace.SMEM)],
        out_specs=pl.BlockSpec((blk_rows, LANES), lambda i: (i, 0)),
        compiler_params=pltpu.CompilerParams(
            dimension_semantics=("parallel",)),                 # shards across v7x's 2 TCs
    )

    def fwd(seed_arr):
        slab = call(seed_arr)
        return slab.reshape(-1)[:total].reshape(batch, 2)

    return jax.jit(fwd)


def random_coordinate_predictor(data, seed=0):
    """Forward pass of RandomCoordinatePredictor: data=(image, ...) -> (B, 2) coords in [0, 224)."""
    image, *_ = data                      # module only uses image.shape[0]
    batch = image.shape[0]
    seed_arr = jnp.asarray(seed, dtype=jnp.int32).reshape((1,))
    return _build_forward(batch)(seed_arr)


# ----------------------------- main ------------------------------------------
if __name__ == "__main__":
    key = jax.random.PRNGKey(0)
    k_img, k_attr = jax.random.split(key)

    B, C, H, W = 2, 4, 16, 16
    image = jax.random.normal(k_img, (B, C, H, W), jnp.float32)
    attributes = jax.random.normal(k_attr, (B, 6), jnp.float32)  # extra tuple members (unused, like *_)
    data = (image, attributes)

    out = jax.block_until_ready(random_coordinate_predictor(data, seed=0))

    # Shape / dtype / range checks (output is random, so no element-wise reference).
    assert out.shape == (B, 2), out.shape
    assert out.dtype == jnp.float32, out.dtype
    assert bool(jnp.all(jnp.isfinite(out))), out
    assert bool(jnp.all(out >= 0.0)) and bool(jnp.all(out < SCALE)), out

    # Same seed -> identical draw; different seed -> different draw.
    out_repeat = jax.block_until_ready(random_coordinate_predictor(data, seed=0))
    assert jnp.array_equal(out, out_repeat), (out, out_repeat)
    out_other = jax.block_until_ready(random_coordinate_predictor(data, seed=1))
    assert not jnp.array_equal(out, out_other), (out, out_other)

    print("KERNEL_OK")
</pallas_src>

<mosaic_0001>
module attributes {stable_mosaic.version = 11 : i64} {
  func.func @_random_coords_kernel(%arg0: i32, %arg1: memref<1xi32, #tpu.memory_space<smem>>, %arg2: memref<8x128xf32, #tpu.memory_space<vmem>>) attributes {dimension_semantics = [#tpu.dimension_semantics<parallel>], iteration_bounds = array<i64: 1>, scalar_prefetch = 0 : i64, scratch_operands = 0 : i64, tpu.core_type = #tpu.core_type<tc>, window_params = [{transform_indices = @transform_0, window_bounds = array<i64: 1>}, {transform_indices = @transform_1, window_bounds = array<i64: 8, 128>}]} {
    %c8_i32 = arith.constant 8 : i32
    %0 = arith.muli %arg0, %c8_i32 : i32
    %1 = tpu.iota {dimensions = array<i32: 0>} : vector<8x128xi32>
    %2 = vector.broadcast %0 : i32 to vector<8x128xi32>
    %3 = arith.addi %1, %2 : vector<8x128xi32>
    %4 = tpu.iota {dimensions = array<i32: 1>} : vector<8x128xi32>
    %c128_i32 = arith.constant 128 : i32
    %5 = vector.broadcast %c128_i32 : i32 to vector<8x128xi32>
    %6 = arith.muli %3, %5 : vector<8x128xi32>
    %7 = arith.addi %6, %4 : vector<8x128xi32>
    %8 = tpu.bitcast %7 : vector<8x128xi32> -> vector<8x128xi32>
    %c0 = arith.constant 0 : index
    %9 = memref.load %arg1[%c0] : memref<1xi32, #tpu.memory_space<smem>>
    %10 = arith.bitcast %9 : i32 to i32
    %c-1640531527_i32 = arith.constant -1640531527 : i32
    %11 = arith.addi %10, %c-1640531527_i32 : i32
    %c16_i32 = arith.constant 16 : i32
    %12 = arith.shrui %11, %c16_i32 : i32
    %13 = arith.xori %11, %12 : i32
    %c2146121005_i32 = arith.constant 2146121005 : i32
    %14 = arith.muli %13, %c2146121005_i32 : i32
    %c15_i32 = arith.constant 15 : i32
    %15 = arith.shrui %14, %c15_i32 : i32
    %16 = arith.xori %14, %15 : i32
    %c-2073254261_i32 = arith.constant -2073254261 : i32
    %17 = arith.muli %16, %c-2073254261_i32 : i32
    %c16_i32_0 = arith.constant 16 : i32
    %18 = arith.shrui %17, %c16_i32_0 : i32
    %19 = arith.xori %17, %18 : i32
    %20 = vector.broadcast %19 : i32 to vector<8x128xi32>
    %21 = arith.xori %8, %20 : vector<8x128xi32>
    %c16_i32_1 = arith.constant 16 : i32
    %22 = vector.broadcast %c16_i32_1 : i32 to vector<8x128xi32>
    %23 = arith.shrui %21, %22 : vector<8x128xi32>
    %24 = arith.xori %21, %23 : vector<8x128xi32>
    %c2146121005_i32_2 = arith.constant 2146121005 : i32
    %25 = vector.broadcast %c2146121005_i32_2 : i32 to vector<8x128xi32>
    %26 = arith.muli %24, %25 : vector<8x128xi32>
    %c15_i32_3 = arith.constant 15 : i32
    %27 = vector.broadcast %c15_i32_3 : i32 to vector<8x128xi32>
    %28 = arith.shrui %26, %27 : vector<8x128xi32>
    %29 = arith.xori %26, %28 : vector<8x128xi32>
    %c-2073254261_i32_4 = arith.constant -2073254261 : i32
    %30 = vector.broadcast %c-2073254261_i32_4 : i32 to vector<8x128xi32>
    %31 = arith.muli %29, %30 : vector<8x128xi32>
    %c16_i32_5 = arith.constant 16 : i32
    %32 = vector.broadcast %c16_i32_5 : i32 to vector<8x128xi32>
    %33 = arith.shrui %31, %32 : vector<8x128xi32>
    %34 = arith.xori %31, %33 : vector<8x128xi32>
    %c-2048144789_i32 = arith.constant -2048144789 : i32
    %35 = vector.broadcast %c-2048144789_i32 : i32 to vector<8x128xi32>
    %36 = arith.addi %34, %35 : vector<8x128xi32>
    %c16_i32_6 = arith.constant 16 : i32
    %37 = vector.broadcast %c16_i32_6 : i32 to vector<8x128xi32>
    %38 = arith.shrui %36, %37 : vector<8x128xi32>
    %39 = arith.xori %36, %38 : vector<8x128xi32>
    %c2146121005_i32_7 = arith.constant 2146121005 : i32
    %40 = vector.broadcast %c2146121005_i32_7 : i32 to vector<8x128xi32>
    %41 = arith.muli %39, %40 : vector<8x128xi32>
    %c15_i32_8 = arith.constant 15 : i32
    %42 = vector.broadcast %c15_i32_8 : i32 to vector<8x128xi32>
    %43 = arith.shrui %41, %42 : vector<8x128xi32>
    %44 = arith.xori %41, %43 : vector<8x128xi32>
    %c-2073254261_i32_9 = arith.constant -2073254261 : i32
    %45 = vector.broadcast %c-2073254261_i32_9 : i32 to vector<8x128xi32>
    %46 = arith.muli %44, %45 : vector<8x128xi32>
    %c16_i32_10 = arith.constant 16 : i32
    %47 = vector.broadcast %c16_i32_10 : i32 to vector<8x128xi32>
    %48 = arith.shrui %46, %47 : vector<8x128xi32>
    %49 = arith.xori %46, %48 : vector<8x128xi32>
    %c9_i32 = arith.constant 9 : i32
    %50 = vector.broadcast %c9_i32 : i32 to vector<8x128xi32>
    %51 = arith.shrui %49, %50 : vector<8x128xi32>
    %c1065353216_i32 = arith.constant 1065353216 : i32
    %52 = vector.broadcast %c1065353216_i32 : i32 to vector<8x128xi32>
    %53 = arith.ori %51, %52 : vector<8x128xi32>
    %54 = tpu.bitcast %53 : vector<8x128xi32> -> vector<8x128xf32>
    %cst = arith.constant 1.000000e+00 : f32
    %55 = vector.broadcast %cst : f32 to vector<8x128xf32>
    %56 = arith.subf %54, %55 : vector<8x128xf32>
    %cst_11 = arith.constant 2.240000e+02 : f32
    %57 = vector.broadcast %cst_11 : f32 to vector<8x128xf32>
    %58 = arith.mulf %56, %57 : vector<8x128xf32>
    %c0_12 = arith.constant 0 : index
    %c0_13 = arith.constant 0 : index
    %59 = vector.load %arg2[%c0_12, %c0_13] : memref<8x128xf32, #tpu.memory_space<vmem>>, vector<8x128xf32>
    tpu.vector_store %arg2[%c0_12, %c0_13], %58 {strides = array<i32>} : memref<8x128xf32, #tpu.memory_space<vmem>>, vector<8x128xf32>,
    return
  }
  func.func @transform_0(%arg0: i32) -> i32 {
    %c0_i32 = arith.constant 0 : i32
    %c0_i32_0 = arith.constant 0 : i32
    return %c0_i32 : i32
  }
  func.func @transform_1(%arg0: i32) -> (i32, i32) {
    %c0_i32 = arith.constant 0 : i32
    %c0_i32_0 = arith.constant 0 : i32
    return %arg0, %c0_i32 : i32, i32
  }
}

</mosaic_0001>

<llo_original>
// kernel: fwd.1
$region0: #{fwd.1}
  #allocation0 [shape = 'u32[]', space=smem, size = 0x4, offset = 0x4, fixed_abs, tag = 'smem constant byte address 0x4 - core index']
  #allocation1 [shape = 'u32[72,128]{1,0:T(1,128)}', space=vmem, size = 0x9000, scoped, tag = 'internal scratch']
  #allocation2 [shape = 's32[1]{0:T(128)S(6)}', space=smem, size = 0x200, scoped, tag = 'scoped memory for fwd.1']
  %s0 = inlined_call_operand.<no memory space> [shape: s32[1], index: 0, kind: input, shape index: {}]
  %s1 = inlined_call_operand.vmem [shape: f32[8,128], index: 1, kind: output, shape index: {}]
  %s2 = sld [smem:[#allocation0]]
  $region14: #{fwd.1} parent=0
    _
  %s4 = ssub.s32 1, %s2
  %s5 = scalar_select 0, %s4, %s2
  %6 = sst [smem:[#allocation2]] %s0
  // Predicated region
  $region2: #{fwd.1} parent=0 // pred_check
    _
  $region3: #{fwd.1} parent=0 // pred_check_branch
    %8 = sbr.rel (0) target = $region5
  $region4: #{fwd.1} parent=0 // pred_region
    _
  $region5: #{fwd.1} parent=0 // pred_fallthru
    _
  %s9 = smul.u32 0, 8
  %v10 = vlaneseq
  %v11 = vshrl.u32 %v10, 7
  %v12 = vstv %s9
  %v13 = vadd.s32 %v11, %v12
  %v14 = vlaneseq
  %v15 = vand.u32 %v14, 127
  %v16 = vmul.u32 %v13, 128
  %v17 = vadd.s32 %v16, %v15
  %s18 = sld [smem:[#allocation2]]
  %s19 = sadd.s32 %s18, 2654435769
  %s20 = sshrl.u32 %s19, 16
  %s21 = sxor.u32 %s19, %s20
  %s22 = smul.u32 %s21, 2146121005
  %s23 = sshrl.u32 %s22, 15
  %s24 = sxor.u32 %s22, %s23
  %s25 = smul.u32 %s24, 2221713035
  %s26 = sshrl.u32 %s25, 16
  %s27 = sxor.u32 %s25, %s26
  %v28 = vstv %s27
  %v29 = vxor.u32 %v17, %v28
  %v30 = vshrl.u32 %v29, 16
  %v31 = vxor.u32 %v29, %v30
  %v32 = vmul.u32 %v31, 2146121005
  %v33 = vshrl.u32 %v32, 15
  %v34 = vxor.u32 %v32, %v33
  %v35 = vmul.u32 %v34, 2221713035
  %v36 = vshrl.u32 %v35, 16
  %v37 = vxor.u32 %v35, %v36
  %v38 = vadd.s32 %v37, 2246822507
  %v39 = vshrl.u32 %v38, 16
  %v40 = vxor.u32 %v38, %v39
  %v41 = vmul.u32 %v40, 2146121005
  %v42 = vshrl.u32 %v41, 15
  %v43 = vxor.u32 %v41, %v42
  %v44 = vmul.u32 %v43, 2221713035
  %v45 = vshrl.u32 %v44, 16
  %v46 = vxor.u32 %v44, %v45
  %v47 = vshrl.u32 %v46, 9
  %v48 = vor.u32 %v47, 1065353216
  %v50 = vsub.f32 %v48, 1.0
  %v51 = vmul.f32 %v50, 224.0
  %52 = vst [vmem:[%s1] sm:$0xff] %v51
  // Predicated region
  $region6: #{fwd.1} parent=0 // pred_check
    _
  $region7: #{fwd.1} parent=0 // pred_check_branch
    %54 = sbr.rel (0) target = $region9
  $region8: #{fwd.1} parent=0 // pred_region
    _
  $region9: #{fwd.1} parent=0 // pred_fallthru
    _
  // Predicated region
  $region10: #{fwd.1} parent=0 // pred_check
    _
  $region11: #{fwd.1} parent=0 // pred_check_branch
    %56 = sbr.rel (0) target = $region13
  $region12: #{fwd.1} parent=0 // pred_region
    _
  $region13: #{fwd.1} parent=0 // pred_fallthru
    _

</llo_original>
